<compile_context>
chip_gen: v6e
topology: v6e:2x2x1
jax: 0.10.0
libtpu: 0.0.40
codegen_flags: <defaults>
</compile_context>

<pallas_src>
import jax
import jax.numpy as jnp
from jax import lax
from jax.experimental import pallas as pl
from jax.experimental.pallas import tpu as pltpu

# contract lhs dim 1 with rhs dim 1  ==  x @ W^T  (weight stays (out, in))
_NT = (((1,), (1,)), ((), ()))


def _or_mlp_kernel(x_ref, w1w_ref, b1w_ref, w2w_ref, b2w_ref,
                   w1h_ref, b1h_ref, w2h_ref, b2h_ref, o_ref):
    B, H, W = x_ref.shape
    x = x_ref[...]                                          # (B, H, W)

    # ---- width branch: per-row MLP over the W axis ----
    # Fold batch into M so the MXU sees (B*H, W) instead of (H, W) per slab.
    xw = x.reshape(B * H, W)                                # layout-free fold
    h = lax.dot_general(xw, w1w_ref[...], _NT,
                        preferred_element_type=jnp.float32) + b1w_ref[...]
    h = jnp.maximum(h, 0.0)
    ow = lax.dot_general(h, w2w_ref[...], _NT,
                         preferred_element_type=jnp.float32) + b2w_ref[...]
    ow = ow.reshape(B, H, W)

    # ---- height branch: per-column MLP over the H axis ----
    # Batched left-multiply  W @ x[b]  for every slab in one dot; the tiny
    # weights are broadcast over B, which avoids any activation transpose.
    w1h = jnp.broadcast_to(w1h_ref[...], (B, H, H))
    w2h = jnp.broadcast_to(w2h_ref[...], (B, H, H))
    b1h = b1h_ref[...][None]                                # (1, H, 1)
    b2h = b2h_ref[...][None]                                # (1, H, 1)
    g = jnp.einsum('bjk,bkw->bjw', w1h, x,
                   preferred_element_type=jnp.float32) + b1h
    g = jnp.maximum(g, 0.0)
    oh = jnp.einsum('bhj,bjw->bhw', w2h, g,
                    preferred_element_type=jnp.float32) + b2h

    o_ref[...] = (ow + oh).astype(o_ref.dtype)


def _pick_block(nc, img):
    """Slabs per grid step: ~256 rows folded into M, >=2 grid steps, VMEM cap."""
    b = max(1, 256 // img)                   # width-branch M ~= 256 rows
    b = min(b, nc)
    if nc >= 2:
        b = min(b, pl.cdiv(nc, 2))           # keep >=2 steps (v7x megacore)
    max_b = max(1, (2 * 1024 * 1024) // (img * img * 4))   # <=2 MiB per block
    return max(1, min(b, max_b))


def or_mlp(x, params, *, block_slabs=None):
    """x: (N, C, H, W) float32 with H == W == img_size."""
    N, C, H, W = x.shape
    assert H == W, "OR_MLP requires a square image (img_size x img_size)"
    img = H
    nc = N * C
    x2 = x.reshape(nc, H, W)

    b = block_slabs if block_slabs is not None else _pick_block(nc, img)
    g = pl.cdiv(nc, b)
    nc_pad = g * b
    if nc_pad != nc:                         # pad so the block divides evenly
        x2 = jnp.concatenate(
            [x2, jnp.zeros((nc_pad - nc, H, W), x2.dtype)], axis=0)

    b1w = params["b1_w"].reshape(1, img)
    b2w = params["b2_w"].reshape(1, img)
    b1h = params["b1_h"].reshape(img, 1)
    b2h = params["b2_h"].reshape(img, 1)

    wfull = lambda i: (0, 0)
    out = pl.pallas_call(
        _or_mlp_kernel,
        out_shape=jax.ShapeDtypeStruct((nc_pad, H, W), x.dtype),
        grid=(g,),
        in_specs=[
            pl.BlockSpec((b, H, W), lambda i: (i, 0, 0)),   # block of b slabs
            pl.BlockSpec((img, img), wfull),                # W1_w (out, in)
            pl.BlockSpec((1, img), wfull),                  # b1_w
            pl.BlockSpec((img, img), wfull),                # W2_w
            pl.BlockSpec((1, img), wfull),                  # b2_w
            pl.BlockSpec((img, img), wfull),                # W1_h
            pl.BlockSpec((img, 1), wfull),                  # b1_h
            pl.BlockSpec((img, img), wfull),                # W2_h
            pl.BlockSpec((img, 1), wfull),                  # b2_h
        ],
        out_specs=pl.BlockSpec((b, H, W), lambda i: (i, 0, 0)),
        compiler_params=pltpu.CompilerParams(
            dimension_semantics=("parallel",)),
    )(x2, params["w1_w"], b1w, params["w2_w"], b2w,
      params["w1_h"], b1h, params["w2_h"], b2h)

    return out[:nc].reshape(N, C, H, W)


def or_mlp_ref(x, params):
    """Pure-JAX reference matching the PyTorch forward semantics."""
    def r_mlp(v, w1, b1, w2, b2):            # MLP over the last axis
        h = jnp.maximum(v @ w1.T + b1, 0.0)
        return h @ w2.T + b2

    out_w = r_mlp(x, params["w1_w"], params["b1_w"],
                  params["w2_w"], params["b2_w"])
    xt = jnp.swapaxes(x, -1, -2)             # x.permute(0, 1, 3, 2)
    out_h = r_mlp(xt, params["w1_h"], params["b1_h"],
                  params["w2_h"], params["b2_h"])
    return out_w + jnp.swapaxes(out_h, -1, -2)


def make_params(key, img_size):
    ks = jax.random.split(key, 8)
    s = 0.1
    return {
        "w1_w": s * jax.random.normal(ks[0], (img_size, img_size), jnp.float32),
        "b1_w": s * jax.random.normal(ks[1], (img_size,), jnp.float32),
        "w2_w": s * jax.random.normal(ks[2], (img_size, img_size), jnp.float32),
        "b2_w": s * jax.random.normal(ks[3], (img_size,), jnp.float32),
        "w1_h": s * jax.random.normal(ks[4], (img_size, img_size), jnp.float32),
        "b1_h": s * jax.random.normal(ks[5], (img_size,), jnp.float32),
        "w2_h": s * jax.random.normal(ks[6], (img_size, img_size), jnp.float32),
        "b2_h": s * jax.random.normal(ks[7], (img_size,), jnp.float32),
    }


if __name__ == "__main__":
    key = jax.random.PRNGKey(0)
    k_x, k_p = jax.random.split(key)

    N, C, IMG = 2, 4, 16                      # batch=2, in_channels=4, img_size=16
    x = jax.random.normal(k_x, (N, C, IMG, IMG), jnp.float32)
    params = make_params(k_p, IMG)

    out = jax.block_until_ready(or_mlp(x, params))
    ref = jax.block_until_ready(or_mlp_ref(x, params))

    assert out.shape == (N, C, IMG, IMG)
    assert jnp.allclose(out, ref, atol=1e-5, rtol=1e-5), "mismatch vs reference"
    print("KERNEL_OK")
</pallas_src>

<mosaic_0001>
module attributes {stable_mosaic.version = 11 : i64} {
  func.func @_or_mlp_kernel(%arg0: i32, %arg1: memref<4x16x16xf32, #tpu.memory_space<vmem>>, %arg2: memref<16x16xf32, #tpu.memory_space<vmem>>, %arg3: memref<1x16xf32, #tpu.memory_space<vmem>>, %arg4: memref<16x16xf32, #tpu.memory_space<vmem>>, %arg5: memref<1x16xf32, #tpu.memory_space<vmem>>, %arg6: memref<16x16xf32, #tpu.memory_space<vmem>>, %arg7: memref<16x1xf32, #tpu.memory_space<vmem>>, %arg8: memref<16x16xf32, #tpu.memory_space<vmem>>, %arg9: memref<16x1xf32, #tpu.memory_space<vmem>>, %arg10: memref<4x16x16xf32, #tpu.memory_space<vmem>>) attributes {dimension_semantics = [#tpu.dimension_semantics<parallel>], iteration_bounds = array<i64: 2>, scalar_prefetch = 0 : i64, scratch_operands = 0 : i64, tpu.core_type = #tpu.core_type<tc>, window_params = [{transform_indices = @transform_0, window_bounds = array<i64: 4, 16, 16>}, {pipeline_mode = #tpu.pipeline_mode<synchronous>, transform_indices = @transform_1, window_bounds = array<i64: 16, 16>}, {pipeline_mode = #tpu.pipeline_mode<synchronous>, transform_indices = @transform_2, window_bounds = array<i64: 1, 16>}, {pipeline_mode = #tpu.pipeline_mode<synchronous>, transform_indices = @transform_3, window_bounds = array<i64: 16, 16>}, {pipeline_mode = #tpu.pipeline_mode<synchronous>, transform_indices = @transform_4, window_bounds = array<i64: 1, 16>}, {pipeline_mode = #tpu.pipeline_mode<synchronous>, transform_indices = @transform_5, window_bounds = array<i64: 16, 16>}, {pipeline_mode = #tpu.pipeline_mode<synchronous>, transform_indices = @transform_6, window_bounds = array<i64: 16, 1>}, {pipeline_mode = #tpu.pipeline_mode<synchronous>, transform_indices = @transform_7, window_bounds = array<i64: 16, 16>}, {pipeline_mode = #tpu.pipeline_mode<synchronous>, transform_indices = @transform_8, window_bounds = array<i64: 16, 1>}, {transform_indices = @transform_9, window_bounds = array<i64: 4, 16, 16>}]} {
    %c0 = arith.constant 0 : index
    %c0_0 = arith.constant 0 : index
    %c0_1 = arith.constant 0 : index
    %0 = vector.load %arg1[%c0, %c0_0, %c0_1] : memref<4x16x16xf32, #tpu.memory_space<vmem>>, vector<4x16x16xf32>
    %1 = vector.shape_cast %0 : vector<4x16x16xf32> to vector<64x16xf32>
    %c0_2 = arith.constant 0 : index
    %c0_3 = arith.constant 0 : index
    %2 = vector.load %arg2[%c0_2, %c0_3] : memref<16x16xf32, #tpu.memory_space<vmem>>, vector<16x16xf32>
    %cst = arith.constant dense<0.000000e+00> : vector<64x16xf32>
    %3 = tpu.matmul %1, %2, %cst {dimension_numbers = #tpu.dot_dimension_numbers<[1], [1], [0], [0], [0, 0, 1, 0], [], []>} : vector<64x16xf32>, vector<16x16xf32>, vector<64x16xf32> -> vector<64x16xf32>
    %c0_4 = arith.constant 0 : index
    %c0_5 = arith.constant 0 : index
    %4 = vector.load %arg3[%c0_4, %c0_5] : memref<1x16xf32, #tpu.memory_space<vmem>>, vector<1x16xf32>
    %5 = vector.broadcast %4 : vector<1x16xf32> to vector<64x16xf32>
    %6 = arith.addf %3, %5 : vector<64x16xf32>
    %cst_6 = arith.constant 0.000000e+00 : f32
    %7 = vector.broadcast %cst_6 : f32 to vector<64x16xf32>
    %8 = arith.maximumf %6, %7 : vector<64x16xf32>
    %c0_7 = arith.constant 0 : index
    %c0_8 = arith.constant 0 : index
    %9 = vector.load %arg4[%c0_7, %c0_8] : memref<16x16xf32, #tpu.memory_space<vmem>>, vector<16x16xf32>
    %cst_9 = arith.constant dense<0.000000e+00> : vector<64x16xf32>
    %10 = tpu.matmul %8, %9, %cst_9 {dimension_numbers = #tpu.dot_dimension_numbers<[1], [1], [0], [0], [0, 0, 1, 0], [], []>} : vector<64x16xf32>, vector<16x16xf32>, vector<64x16xf32> -> vector<64x16xf32>
    %c0_10 = arith.constant 0 : index
    %c0_11 = arith.constant 0 : index
    %11 = vector.load %arg5[%c0_10, %c0_11] : memref<1x16xf32, #tpu.memory_space<vmem>>, vector<1x16xf32>
    %12 = vector.broadcast %11 : vector<1x16xf32> to vector<64x16xf32>
    %13 = arith.addf %10, %12 : vector<64x16xf32>
    %14 = vector.shape_cast %13 : vector<64x16xf32> to vector<4x16x16xf32>
    %c0_12 = arith.constant 0 : index
    %c0_13 = arith.constant 0 : index
    %15 = vector.load %arg6[%c0_12, %c0_13] : memref<16x16xf32, #tpu.memory_space<vmem>>, vector<16x16xf32>
    %16 = vector.shape_cast %15 : vector<16x16xf32> to vector<1x16x16xf32>
    %17 = vector.broadcast %16 : vector<1x16x16xf32> to vector<4x16x16xf32>
    %c0_14 = arith.constant 0 : index
    %c0_15 = arith.constant 0 : index
    %18 = vector.load %arg8[%c0_14, %c0_15] : memref<16x16xf32, #tpu.memory_space<vmem>>, vector<16x16xf32>
    %19 = vector.shape_cast %18 : vector<16x16xf32> to vector<1x16x16xf32>
    %20 = vector.broadcast %19 : vector<1x16x16xf32> to vector<4x16x16xf32>
    %c0_16 = arith.constant 0 : index
    %c0_17 = arith.constant 0 : index
    %21 = vector.load %arg7[%c0_16, %c0_17] : memref<16x1xf32, #tpu.memory_space<vmem>>, vector<16x1xf32>
    %22 = vector.shape_cast %21 : vector<16x1xf32> to vector<1x16x1xf32>
    %c0_18 = arith.constant 0 : index
    %c0_19 = arith.constant 0 : index
    %23 = vector.load %arg9[%c0_18, %c0_19] : memref<16x1xf32, #tpu.memory_space<vmem>>, vector<16x1xf32>
    %24 = vector.shape_cast %23 : vector<16x1xf32> to vector<1x16x1xf32>
    "tpu.trace_start"() <{level = 10 : i32, message = "bjk,bkw->bjw"}> : () -> ()
    %cst_20 = arith.constant dense<0.000000e+00> : vector<4x16x16xf32>
    %25 = tpu.matmul %17, %0, %cst_20 {dimension_numbers = #tpu.dot_dimension_numbers<[2], [1], [1], [2], [0, 0, 0, 1, 1, 2], [0], [0]>} : vector<4x16x16xf32>, vector<4x16x16xf32>, vector<4x16x16xf32> -> vector<4x16x16xf32>
    "tpu.trace_stop"() : () -> ()
    %26 = vector.broadcast %22 : vector<1x16x1xf32> to vector<4x16x16xf32>
    %27 = arith.addf %25, %26 : vector<4x16x16xf32>
    %cst_21 = arith.constant 0.000000e+00 : f32
    %28 = vector.broadcast %cst_21 : f32 to vector<4x16x16xf32>
    %29 = arith.maximumf %27, %28 : vector<4x16x16xf32>
    "tpu.trace_start"() <{level = 10 : i32, message = "bhj,bjw->bhw"}> : () -> ()
    %cst_22 = arith.constant dense<0.000000e+00> : vector<4x16x16xf32>
    %30 = tpu.matmul %20, %29, %cst_22 {dimension_numbers = #tpu.dot_dimension_numbers<[2], [1], [1], [2], [0, 0, 0, 1, 1, 2], [0], [0]>} : vector<4x16x16xf32>, vector<4x16x16xf32>, vector<4x16x16xf32> -> vector<4x16x16xf32>
    "tpu.trace_stop"() : () -> ()
    %31 = vector.broadcast %24 : vector<1x16x1xf32> to vector<4x16x16xf32>
    %32 = arith.addf %30, %31 : vector<4x16x16xf32>
    %33 = arith.addf %14, %32 : vector<4x16x16xf32>
    %c0_23 = arith.constant 0 : index
    %c0_24 = arith.constant 0 : index
    %c0_25 = arith.constant 0 : index
    %34 = vector.load %arg10[%c0_23, %c0_24, %c0_25] : memref<4x16x16xf32, #tpu.memory_space<vmem>>, vector<4x16x16xf32>
    tpu.vector_store %arg10[%c0_23, %c0_24, %c0_25], %33 {strides = array<i32>} : memref<4x16x16xf32, #tpu.memory_space<vmem>>, vector<4x16x16xf32>,
    return
  }
  func.func @transform_0(%arg0: i32) -> (i32, i32, i32) {
    %c0_i32 = arith.constant 0 : i32
    %c0_i32_0 = arith.constant 0 : i32
    %c0_i32_1 = arith.constant 0 : i32
    return %arg0, %c0_i32, %c0_i32_0 : i32, i32, i32
  }
  func.func @transform_1(%arg0: i32) -> (i32, i32) {
    %c0_i32 = arith.constant 0 : i32
    %c0_i32_0 = arith.constant 0 : i32
    %c0_i32_1 = arith.constant 0 : i32
    return %c0_i32, %c0_i32_0 : i32, i32
  }
  func.func @transform_2(%arg0: i32) -> (i32, i32) {
    %c0_i32 = arith.constant 0 : i32
    %c0_i32_0 = arith.constant 0 : i32
    %c0_i32_1 = arith.constant 0 : i32
    return %c0_i32, %c0_i32_0 : i32, i32
  }
  func.func @transform_3(%arg0: i32) -> (i32, i32) {
    %c0_i32 = arith.constant 0 : i32
    %c0_i32_0 = arith.constant 0 : i32
    %c0_i32_1 = arith.constant 0 : i32
    return %c0_i32, %c0_i32_0 : i32, i32
  }
  func.func @transform_4(%arg0: i32) -> (i32, i32) {
    %c0_i32 = arith.constant 0 : i32
    %c0_i32_0 = arith.constant 0 : i32
    %c0_i32_1 = arith.constant 0 : i32
    return %c0_i32, %c0_i32_0 : i32, i32
  }
  func.func @transform_5(%arg0: i32) -> (i32, i32) {
    %c0_i32 = arith.constant 0 : i32
    %c0_i32_0 = arith.constant 0 : i32
    %c0_i32_1 = arith.constant 0 : i32
    return %c0_i32, %c0_i32_0 : i32, i32
  }
  func.func @transform_6(%arg0: i32) -> (i32, i32) {
    %c0_i32 = arith.constant 0 : i32
    %c0_i32_0 = arith.constant 0 : i32
    %c0_i32_1 = arith.constant 0 : i32
    return %c0_i32, %c0_i32_0 : i32, i32
  }
  func.func @transform_7(%arg0: i32) -> (i32, i32) {
    %c0_i32 = arith.constant 0 : i32
    %c0_i32_0 = arith.constant 0 : i32
    %c0_i32_1 = arith.constant 0 : i32
    return %c0_i32, %c0_i32_0 : i32, i32
  }
  func.func @transform_8(%arg0: i32) -> (i32, i32) {
    %c0_i32 = arith.constant 0 : i32
    %c0_i32_0 = arith.constant 0 : i32
    %c0_i32_1 = arith.constant 0 : i32
    return %c0_i32, %c0_i32_0 : i32, i32
  }
  func.func @transform_9(%arg0: i32) -> (i32, i32, i32) {
    %c0_i32 = arith.constant 0 : i32
    %c0_i32_0 = arith.constant 0 : i32
    %c0_i32_1 = arith.constant 0 : i32
    return %arg0, %c0_i32, %c0_i32_0 : i32, i32, i32
  }
}

</mosaic_0001>

<llo_original>
// kernel: tpu_custom_call.1
$region0: #{tpu_custom_call.1}
  #allocation0 [shape = 'u32[]', space=smem, size = 0x4, offset = 0x4, fixed_abs, tag = 'smem constant byte address 0x4 - core index']
  #allocation1 [shape = 'u32[144,128]{1,0:T(1,128)}', space=vmem, size = 0x12000, scoped, tag = 'internal scratch']
  %s0 = inlined_call_operand.hbm [shape: f32[8,16,16], index: 0, kind: input, shape index: {}]
  %s1 = inlined_call_operand.vmem [shape: f32[16,16], index: 1, kind: input, shape index: {}]
  %s2 = inlined_call_operand.vmem [shape: f32[1,16], index: 2, kind: input, shape index: {}]
  %s3 = inlined_call_operand.vmem [shape: f32[16,16], index: 3, kind: input, shape index: {}]
  %s4 = inlined_call_operand.vmem [shape: f32[1,16], index: 4, kind: input, shape index: {}]
  %s5 = inlined_call_operand.hbm [shape: f32[16,16], index: 5, kind: input, shape index: {}]
  %s6 = inlined_call_operand.vmem [shape: f32[16,1], index: 6, kind: input, shape index: {}]
  %s7 = inlined_call_operand.hbm [shape: f32[16,16], index: 7, kind: input, shape index: {}]
  %s8 = inlined_call_operand.vmem [shape: f32[16,1], index: 8, kind: input, shape index: {}]
  %s9 = inlined_call_operand.hbm [shape: f32[8,16,16], index: 9, kind: output, shape index: {}]
  %s10 = sld [smem:[#allocation0]]
  $region81: #{tpu_custom_call.1} parent=0
    _
  %s12 = ssub.s32 1, %s10
  %s13 = scalar_select 0, %s12, %s10
  $region1: #{tpu_custom_call.1} parent=0
    #allocation2 [shape = 'u8[65536]{0}', space=vmem, size = 0x10000, scoped, tag = 'input window, operand 0']
    #allocation3 [shape = 's32[2]{0}', space=sflag, size = 0x8, scoped, tag = 'scoped memory for tpu_custom_call.1']
    #allocation4 [shape = 's32[2]{0}', space=sflag, size = 0x8, scoped, tag = 'scoped memory for tpu_custom_call.1']
    #allocation5 [shape = 'u8[8192]{0}', space=vmem, size = 0x2000, scoped, tag = 'input window, operand 5, single buffered']
    #allocation6 [shape = 's32[1]{0}', space=sflag, size = 0x4, scoped, tag = 'scoped memory for tpu_custom_call.1']
    #allocation7 [shape = 'u8[8192]{0}', space=vmem, size = 0x2000, scoped, tag = 'input window, operand 7, single buffered']
    #allocation8 [shape = 'u8[65536]{0}', space=vmem, size = 0x10000, scoped, tag = 'output window, operand 0']
    %14 = vsyncpa [#allocation3], 0
    %s15 = scalar_lea.sflag [#allocation3], 1
    %16 = vsyncpa %s15, 0
    %17 = vsyncpa [#allocation6], 0
    %18 = vsyncpa [#allocation4], 0
    %s19 = scalar_lea.sflag [#allocation4], 1
    %20 = vsyncpa %s19, 0
    loop: start=0, step=1, limit=4
    $region2: #{tpu_custom_call.1} parent=1 // loop_pre_header
      _
    $region3: #{tpu_custom_call.1} parent=1 // loop_header
      %s22 = sphi 0, %s26
      %p23 = scmp.ge.s32.totalorder %s22, 4
      %s32 = sphi 0, %s34
      %s35 = sphi 0, %s32
      %s36 = sphi 0, %s35
      %s52 = sphi 0, %s36
      %s56 = sphi 0, %s56
      %s58 = sphi 0, %s56
      %s59 = sphi 0, %s58
      %s73 = sphi 0, %s59
      %s77 = sphi 0, %s77
      %s79 = sphi 0, %s77
      %s80 = sphi 0, %s79
      %s94 = sphi 0, %s80
      %s98 = sphi 0, %s98
      %s100 = sphi 0, %s98
      %s101 = sphi 0, %s100
      %s115 = sphi 0, %s101
      %s119 = sphi 0, %s119
      %s121 = sphi 0, %s119
      %s122 = sphi 0, %s121
      %s136 = sphi 0, %s122
      %s140 = sphi 0, %s140
      %s142 = sphi 0, %s140
      %s143 = sphi 0, %s142
      %s157 = sphi 0, %s143
      %s161 = sphi 0, %s161
      %s163 = sphi 0, %s161
      %s164 = sphi 0, %s163
      %s178 = sphi 0, %s164
      %s182 = sphi 0, %s182
      %s184 = sphi 0, %s182
      %s185 = sphi 0, %s184
      %s199 = sphi 0, %s185
      %s203 = sphi 0, %s203
      %s205 = sphi 0, %s203
      %s206 = sphi 0, %s205
      %s220 = sphi 0, %s206
      %s226 = sphi 0, %s228
      %s229 = sphi 0, %s226
      %s230 = sphi 0, %s229
      %s246 = sphi 0, %s230
    $region4: #{tpu_custom_call.1} parent=1 // loop_header_branch
      %25 = sbr.rel (%p23) target = $region8
    $region5: #{tpu_custom_call.1} parent=1 // loop_body
      %s27 = ssub.s32 %s22, 1
      %s28 = ssub.s32 %s22, 2
      %s29 = sadd.s32 %s22, 1
      %s30 = ssub.s32 %s22, %s29
      %p31 = scmp.eq.s32.totalorder %s30, 0
      %s33 = sadd.s32 %s32, 1
      %s34 = scalar_select %p31, %s32, %s33
      %p37 = pneg %p31
      %p38 = scmp.eq.s32.totalorder %s22, 1
      %p39 = por %p37, %p38
      %p40 = scmp.ne.s32.totalorder %s32, %s35
      %p41 = scmp.eq.s32.totalorder %s22, 0
      %p42 = por %p40, %p41
      %p43 = scmp.ne.s32.totalorder %s32, %s35
      %p44 = scmp.eq.s32.totalorder %s27, 1
      %p45 = por %p43, %p44
      %p46 = scmp.ne.s32.totalorder %s35, %s36
      %p47 = scmp.eq.s32.totalorder %s27, 0
      %p48 = por %p46, %p47
      %p49 = scmp.ne.s32.totalorder %s35, %s36
      %p50 = scmp.eq.s32.totalorder %s28, 1
      %p51 = por %p49, %p50
      %p53 = scmp.ne.s32.totalorder %s36, %s52
      %p54 = scmp.eq.s32.totalorder %s28, 0
      %p55 = por %p53, %p54
      %s57 = sadd.s32 %s56, 1
      %p60 = scmp.eq.s32.totalorder %s22, 1
      %p61 = scmp.ne.s32.totalorder %s56, %s58
      %p62 = scmp.eq.s32.totalorder %s22, 0
      %p63 = por %p61, %p62
      %p64 = scmp.ne.s32.totalorder %s56, %s58
      %p65 = scmp.eq.s32.totalorder %s27, 1
      %p66 = por %p64, %p65
      %p67 = scmp.ne.s32.totalorder %s58, %s59
      %p68 = scmp.eq.s32.totalorder %s27, 0
      %p69 = por %p67, %p68
      %p70 = scmp.ne.s32.totalorder %s58, %s59
      %p71 = scmp.eq.s32.totalorder %s28, 1
      %p72 = por %p70, %p71
      %p74 = scmp.ne.s32.totalorder %s59, %s73
      %p75 = scmp.eq.s32.totalorder %s28, 0
      %p76 = por %p74, %p75
      %s78 = sadd.s32 %s77, 1
      %p81 = scmp.eq.s32.totalorder %s22, 1
      %p82 = scmp.ne.s32.totalorder %s77, %s79
      %p83 = scmp.eq.s32.totalorder %s22, 0
      %p84 = por %p82, %p83
      %p85 = scmp.ne.s32.totalorder %s77, %s79
      %p86 = scmp.eq.s32.totalorder %s27, 1
      %p87 = por %p85, %p86
      %p88 = scmp.ne.s32.totalorder %s79, %s80
      %p89 = scmp.eq.s32.totalorder %s27, 0
      %p90 = por %p88, %p89
      %p91 = scmp.ne.s32.totalorder %s79, %s80
      %p92 = scmp.eq.s32.totalorder %s28, 1
      %p93 = por %p91, %p92
      %p95 = scmp.ne.s32.totalorder %s80, %s94
      %p96 = scmp.eq.s32.totalorder %s28, 0
      %p97 = por %p95, %p96
      %s99 = sadd.s32 %s98, 1
      %p102 = scmp.eq.s32.totalorder %s22, 1
      %p103 = scmp.ne.s32.totalorder %s98, %s100
      %p104 = scmp.eq.s32.totalorder %s22, 0
      %p105 = por %p103, %p104
      %p106 = scmp.ne.s32.totalorder %s98, %s100
      %p107 = scmp.eq.s32.totalorder %s27, 1
      %p108 = por %p106, %p107
      %p109 = scmp.ne.s32.totalorder %s100, %s101
      %p110 = scmp.eq.s32.totalorder %s27, 0
      %p111 = por %p109, %p110
      %p112 = scmp.ne.s32.totalorder %s100, %s101
      %p113 = scmp.eq.s32.totalorder %s28, 1
      %p114 = por %p112, %p113
      %p116 = scmp.ne.s32.totalorder %s101, %s115
      %p117 = scmp.eq.s32.totalorder %s28, 0
      %p118 = por %p116, %p117
      %s120 = sadd.s32 %s119, 1
      %p123 = scmp.eq.s32.totalorder %s22, 1
      %p124 = scmp.ne.s32.totalorder %s119, %s121
      %p125 = scmp.eq.s32.totalorder %s22, 0
      %p126 = por %p124, %p125
      %p127 = scmp.ne.s32.totalorder %s119, %s121
      %p128 = scmp.eq.s32.totalorder %s27, 1
      %p129 = por %p127, %p128
      %p130 = scmp.ne.s32.totalorder %s121, %s122
      %p131 = scmp.eq.s32.totalorder %s27, 0
      %p132 = por %p130, %p131
      %p133 = scmp.ne.s32.totalorder %s121, %s122
      %p134 = scmp.eq.s32.totalorder %s28, 1
      %p135 = por %p133, %p134
      %p137 = scmp.ne.s32.totalorder %s122, %s136
      %p138 = scmp.eq.s32.totalorder %s28, 0
      %p139 = por %p137, %p138
      %s141 = sadd.s32 %s140, 1
      %p144 = scmp.eq.s32.totalorder %s22, 1
      %p145 = scmp.ne.s32.totalorder %s140, %s142
      %p146 = scmp.eq.s32.totalorder %s22, 0
      %p147 = por %p145, %p146
      %p148 = scmp.ne.s32.totalorder %s140, %s142
      %p149 = scmp.eq.s32.totalorder %s27, 1
      %p150 = por %p148, %p149
      %p151 = scmp.ne.s32.totalorder %s142, %s143
      %p152 = scmp.eq.s32.totalorder %s27, 0
      %p153 = por %p151, %p152
      %p154 = scmp.ne.s32.totalorder %s142, %s143
      %p155 = scmp.eq.s32.totalorder %s28, 1
      %p156 = por %p154, %p155
      %p158 = scmp.ne.s32.totalorder %s143, %s157
      %p159 = scmp.eq.s32.totalorder %s28, 0
      %p160 = por %p158, %p159
      %s162 = sadd.s32 %s161, 1
      %p165 = scmp.eq.s32.totalorder %s22, 1
      %p166 = scmp.ne.s32.totalorder %s161, %s163
      %p167 = scmp.eq.s32.totalorder %s22, 0
      %p168 = por %p166, %p167
      %p169 = scmp.ne.s32.totalorder %s161, %s163
      %p170 = scmp.eq.s32.totalorder %s27, 1
      %p171 = por %p169, %p170
      %p172 = scmp.ne.s32.totalorder %s163, %s164
      %p173 = scmp.eq.s32.totalorder %s27, 0
      %p174 = por %p172, %p173
      %p175 = scmp.ne.s32.totalorder %s163, %s164
      %p176 = scmp.eq.s32.totalorder %s28, 1
      %p177 = por %p175, %p176
      %p179 = scmp.ne.s32.totalorder %s164, %s178
      %p180 = scmp.eq.s32.totalorder %s28, 0
      %p181 = por %p179, %p180
      %s183 = sadd.s32 %s182, 1
      %p186 = scmp.eq.s32.totalorder %s22, 1
      %p187 = scmp.ne.s32.totalorder %s182, %s184
      %p188 = scmp.eq.s32.totalorder %s22, 0
      %p189 = por %p187, %p188
      %p190 = scmp.ne.s32.totalorder %s182, %s184
      %p191 = scmp.eq.s32.totalorder %s27, 1
      %p192 = por %p190, %p191
      %p193 = scmp.ne.s32.totalorder %s184, %s185
      %p194 = scmp.eq.s32.totalorder %s27, 0
      %p195 = por %p193, %p194
      %p196 = scmp.ne.s32.totalorder %s184, %s185
      %p197 = scmp.eq.s32.totalorder %s28, 1
      %p198 = por %p196, %p197
      %p200 = scmp.ne.s32.totalorder %s185, %s199
      %p201 = scmp.eq.s32.totalorder %s28, 0
      %p202 = por %p200, %p201
      %s204 = sadd.s32 %s203, 1
      %p207 = scmp.eq.s32.totalorder %s22, 1
      %p208 = scmp.ne.s32.totalorder %s203, %s205
      %p209 = scmp.eq.s32.totalorder %s22, 0
      %p210 = por %p208, %p209
      %p211 = scmp.ne.s32.totalorder %s203, %s205
      %p212 = scmp.eq.s32.totalorder %s27, 1
      %p213 = por %p211, %p212
      %p214 = scmp.ne.s32.totalorder %s205, %s206
      %p215 = scmp.eq.s32.totalorder %s27, 0
      %p216 = por %p214, %p215
      %p217 = scmp.ne.s32.totalorder %s205, %s206
      %p218 = scmp.eq.s32.totalorder %s28, 1
      %p219 = por %p217, %p218
      %p221 = scmp.ne.s32.totalorder %s206, %s220
      %p222 = scmp.eq.s32.totalorder %s28, 0
      %p223 = por %p221, %p222
      %s224 = ssub.s32 %s22, %s29
      %p225 = scmp.eq.s32.totalorder %s224, 0
      %s227 = sadd.s32 %s226, 1
      %s228 = scalar_select %p225, %s226, %s227
      %p231 = pneg %p225
      %p232 = scmp.eq.s32.totalorder %s22, 1
      %p233 = por %p231, %p232
      %p234 = scmp.ne.s32.totalorder %s226, %s229
      %p235 = scmp.eq.s32.totalorder %s22, 0
      %p236 = por %p234, %p235
      %p237 = scmp.ne.s32.totalorder %s226, %s229
      %p238 = scmp.eq.s32.totalorder %s27, 1
      %p239 = por %p237, %p238
      %p240 = scmp.ne.s32.totalorder %s229, %s230
      %p241 = scmp.eq.s32.totalorder %s27, 0
      %p242 = por %p240, %p241
      %p243 = scmp.ne.s32.totalorder %s229, %s230
      %p244 = scmp.eq.s32.totalorder %s28, 1
      %p245 = por %p243, %p244
      %p247 = scmp.ne.s32.totalorder %s230, %s246
      %p248 = scmp.eq.s32.totalorder %s28, 0
      %p249 = por %p247, %p248
      %p250 = scmp.le.s32.totalorder 1, %s22
      %p251 = scmp.lt.s32.totalorder %s22, 3
      %p252 = pnand %p250, %p251
      %p253 = pneg %p252
      // Predicated region
      $region9: #{tpu_custom_call.1} parent=5 // pred_check
        _
      $region10: #{tpu_custom_call.1} parent=5 // pred_check_branch
        %255 = sbr.rel (%p252) target = $region12
      $region11: #{tpu_custom_call.1} parent=5 // pred_region
        %s256 = ssub.s32 %s22, 1
        // Predicated region
        $region13: #{tpu_custom_call.1} parent=11 // pred_check
          %p257 = pneg %p69
        $region14: #{tpu_custom_call.1} parent=11 // pred_check_branch
          %259 = sbr.rel (%p257) target = $region16
        $region15: #{tpu_custom_call.1} parent=11 // pred_region
          _
        $region16: #{tpu_custom_call.1} parent=11 // pred_fallthru
          _
        // Predicated region
        $region17: #{tpu_custom_call.1} parent=11 // pred_check
          %p260 = pneg %p90
        $region18: #{tpu_custom_call.1} parent=11 // pred_check_branch
          %262 = sbr.rel (%p260) target = $region20
        $region19: #{tpu_custom_call.1} parent=11 // pred_region
          _
        $region20: #{tpu_custom_call.1} parent=11 // pred_fallthru
          _
        // Predicated region
        $region21: #{tpu_custom_call.1} parent=11 // pred_check
          %p263 = pneg %p111
        $region22: #{tpu_custom_call.1} parent=11 // pred_check_branch
          %265 = sbr.rel (%p263) target = $region24
        $region23: #{tpu_custom_call.1} parent=11 // pred_region
          _
        $region24: #{tpu_custom_call.1} parent=11 // pred_fallthru
          _
        // Predicated region
        $region25: #{tpu_custom_call.1} parent=11 // pred_check
          %p266 = pneg %p132
        $region26: #{tpu_custom_call.1} parent=11 // pred_check_branch
          %268 = sbr.rel (%p266) target = $region28
        $region27: #{tpu_custom_call.1} parent=11 // pred_region
          _
        $region28: #{tpu_custom_call.1} parent=11 // pred_fallthru
          _
        // Predicated region
        $region29: #{tpu_custom_call.1} parent=11 // pred_check
          %p269 = pneg %p153
        $region30: #{tpu_custom_call.1} parent=11 // pred_check_branch
          %271 = sbr.rel (%p269) target = $region32
        $region31: #{tpu_custom_call.1} parent=11 // pred_region
          %s273 = ssub.s32 256, 256
          %274 = vsyncadd [#allocation6], %s273
          %s275 = sshll.u32 [#allocation5], 4
          %s276 = int_to_ptr.vmem [resolvable:$true] %s275
          %281 = dma.hbm_to_vmem [thread:$0]  %s5, 256, %s276, [#allocation6], 128, 128, 8
        $region32: #{tpu_custom_call.1} parent=11 // pred_fallthru
          _
        // Predicated region
        $region33: #{tpu_custom_call.1} parent=11 // pred_check
          %p282 = pneg %p174
        $region34: #{tpu_custom_call.1} parent=11 // pred_check_branch
          %284 = sbr.rel (%p282) target = $region36
        $region35: #{tpu_custom_call.1} parent=11 // pred_region
          _
        $region36: #{tpu_custom_call.1} parent=11 // pred_fallthru
          _
        // Predicated region
        $region37: #{tpu_custom_call.1} parent=11 // pred_check
          %p285 = pneg %p195
        $region38: #{tpu_custom_call.1} parent=11 // pred_check_branch
          %287 = sbr.rel (%p285) target = $region40
        $region39: #{tpu_custom_call.1} parent=11 // pred_region
          %s289 = ssub.s32 256, 256
          %290 = vsyncadd [#allocation6], %s289
          %s291 = sshll.u32 [#allocation7], 4
          %s292 = int_to_ptr.vmem [resolvable:$true] %s291
          %297 = dma.hbm_to_vmem [thread:$0]  %s7, 256, %s292, [#allocation6], 128, 128, 8
        $region40: #{tpu_custom_call.1} parent=11 // pred_fallthru
          _
        // Predicated region
        $region41: #{tpu_custom_call.1} parent=11 // pred_check
          %p298 = pneg %p216
        $region42: #{tpu_custom_call.1} parent=11 // pred_check_branch
          %300 = sbr.rel (%p298) target = $region44
        $region43: #{tpu_custom_call.1} parent=11 // pred_region
          _
        $region44: #{tpu_custom_call.1} parent=11 // pred_fallthru
          _
      $region12: #{tpu_custom_call.1} parent=5 // pred_fallthru
        _
      %p301 = scmp.lt.s32.totalorder %s22, 2
      // Predicated region
      $region45: #{tpu_custom_call.1} parent=5 // pred_check
        %p302 = pneg %p301
      $region46: #{tpu_custom_call.1} parent=5 // pred_check_branch
        %304 = sbr.rel (%p302) target = $region48
      $region47: #{tpu_custom_call.1} parent=5 // pred_region
        // Predicated region
        $region49: #{tpu_custom_call.1} parent=47 // pred_check
          %p305 = pneg %p42
        $region50: #{tpu_custom_call.1} parent=47 // pred_check_branch
          %307 = sbr.rel (%p305) target = $region52
        $region51: #{tpu_custom_call.1} parent=47 // pred_region
          %s308 = sand.u32 %s32, 1
          %s309 = scalar_lea.sflag [#allocation3], %s308
          %s310 = sand.u32 %s32, 1
          %s311 = smul.addr %s310, 64
          %s312 = scalar_lea.vmem [#allocation2], %s311
          %s313 = smul.u32 4, %s22
          %s315 = ssub.s32 1024, 1024
          %316 = vsyncadd %s309, %s315
          %s317 = smul.addr %s313, 2
          %s318 = smul.addr %s317, 128
          %s319 = scalar_lea.hbm %s0, %s318
          %s320 = sshll.u32 %s312, 4
          %s321 = int_to_ptr.vmem [resolvable:$true] %s320
          %326 = dma.hbm_to_vmem [thread:$0]  %s319, 1024, %s321, %s309, 128, 128, 8
        $region52: #{tpu_custom_call.1} parent=47 // pred_fallthru
          _
      $region48: #{tpu_custom_call.1} parent=5 // pred_fallthru
        _
      %p327 = scmp.le.s32.totalorder 1, %s22
      %p328 = scmp.lt.s32.totalorder %s22, 3
      %p329 = pnand %p327, %p328
      %p330 = pneg %p329
      // Predicated region
      $region53: #{tpu_custom_call.1} parent=5 // pred_check
        _
      $region54: #{tpu_custom_call.1} parent=5 // pred_check_branch
        %332 = sbr.rel (%p329) target = $region56
      $region55: #{tpu_custom_call.1} parent=5 // pred_region
        %s333 = ssub.s32 %s22, 1
        %s334 = sand.u32 %s35, 1
        %s335 = scalar_lea.sflag [#allocation3], %s334
        %s336 = sand.u32 %s35, 1
        %s337 = smul.addr %s336, 64
        %s338 = scalar_lea.vmem [#allocation2], %s337
        // Predicated region
        $region57: #{tpu_custom_call.1} parent=55 // pred_check
          %p339 = pneg %p48
        $region58: #{tpu_custom_call.1} parent=55 // pred_check_branch
          %341 = sbr.rel (%p339) target = $region60
        $region59: #{tpu_custom_call.1} parent=55 // pred_region
          %342 = dma.done %s335, 1024
        $region60: #{tpu_custom_call.1} parent=55 // pred_fallthru
          _
        // Predicated region
        $region61: #{tpu_custom_call.1} parent=55 // pred_check
          %p343 = pneg %p153
        $region62: #{tpu_custom_call.1} parent=55 // pred_check_branch
          %345 = sbr.rel (%p343) target = $region64
        $region63: #{tpu_custom_call.1} parent=55 // pred_region
          %346 = dma.done [#allocation6], 256
        $region64: #{tpu_custom_call.1} parent=55 // pred_fallthru
          _
        // Predicated region
        $region65: #{tpu_custom_call.1} parent=55 // pred_check
          %p347 = pneg %p195
        $region66: #{tpu_custom_call.1} parent=55 // pred_check_branch
          %349 = sbr.rel (%p347) target = $region68
        $region67: #{tpu_custom_call.1} parent=55 // pred_region
          %350 = dma.done [#allocation6], 256
        $region68: #{tpu_custom_call.1} parent=55 // pred_fallthru
          _
        %s351 = sand.u32 %s35, 1
        %s352 = scalar_lea.sflag [#allocation3], %s351
        %s353 = sand.u32 %s35, 1
        %s354 = smul.addr %s353, 64
        %s355 = scalar_lea.vmem [#allocation2], %s354
        %p356 = pneg %p48
        %p357 = pneg %p45
        %p358 = pneg %p69
        %p359 = pneg %p66
        %p360 = pneg %p90
        %p361 = pneg %p87
        %p362 = pneg %p111
        %p363 = pneg %p108
        %p364 = pneg %p132
        %p365 = pneg %p129
        %p366 = pneg %p153
        %p367 = pneg %p150
        %p368 = pneg %p174
        %p369 = pneg %p171
        %p370 = pneg %p195
        %p371 = pneg %p192
        %p372 = pneg %p216
        %p373 = pneg %p213
        %p374 = pneg %p242
        %p375 = pneg %p239
        %s376 = sand.u32 %s229, 1
        %s377 = scalar_lea.sflag [#allocation4], %s376
        %s378 = sand.u32 %s229, 1
        %s379 = smul.addr %s378, 64
        %s380 = scalar_lea.vmem [#allocation8], %s379
        %s381 = smul.u32 4, %s27
        %s382 = smul.u32 4, %s27
        %v383 = vld [vmem:[%s338] sm:$0xff]
        %v384 = vld [vmem:[%s338 + $0x8] sm:$0xff]
        %v385 = vld [vmem:[%s338 + $0x10] sm:$0xff]
        %v386 = vld [vmem:[%s338 + $0x18] sm:$0xff]
        %v387 = vld [vmem:[%s338 + $0x20] sm:$0xff]
        %v388 = vld [vmem:[%s338 + $0x28] sm:$0xff]
        %v389 = vld [vmem:[%s338 + $0x30] sm:$0xff]
        %v390 = vld [vmem:[%s338 + $0x38] sm:$0xff]
        %v391 = vld [vmem:[%s1] sm:$0xff]
        %v392 = vld [vmem:[%s1 + $0x8] sm:$0xff]
        %v393 = vld [vmem:[%s2] sm:$0x1]
        %v395 = vlaneseq
        %v396 = vshrl.u32 %v395, 7
        %v397 = vsub.s32 0, %v396
        %v398 = vrot.slane %v393, %v397
        %vm400 = vcmask 130048
        %v402 = vsel %vm400, %v383, 0
        %v405 = vsel %vm400, %v384, 0
        %v408 = vsel %vm400, %v385, 0
        %v411 = vsel %vm400, %v386, 0
        %v414 = vsel %vm400, %v387, 0
        %v417 = vsel %vm400, %v388, 0
        %v420 = vsel %vm400, %v389, 0
        %v423 = vsel %vm400, %v390, 0
        %v426 = vsel %vm400, %v391, 0
        %v429 = vsel %vm400, %v392, 0
        %431 = vmatprep.subr.mxu0 0.0
        %432 = vmatpush1.xpose.msra.mxu0 0.0
        %433 = vmatprep.subr.mxu0 0.0
        %434 = vmatpush1.xpose.msra.mxu0 0.0
        %435 = vmatprep.subr.mxu0 0.0
        %436 = vmatpush1.xpose.msra.mxu0 0.0
        %437 = vmatprep.subr.mxu0 0.0
        %438 = vmatpush1.xpose.msra.mxu0 0.0
        %439 = vmatprep.subr.mxu0 0.0
        %440 = vmatpush1.xpose.msra.mxu0 0.0
        %441 = vmatprep.subr.mxu0 0.0
        %442 = vmatpush1.xpose.msra.mxu0 0.0
        %443 = vmatprep.subr.mxu0 0.0
        %444 = vmatpush1.xpose.msra.mxu0 0.0
        %445 = vmatprep.subr.mxu0 0.0
        %446 = vmatpush1.xpose.msra.mxu0 0.0
        %447 = vmatprep.subr.mxu0 0.0
        %448 = vmatpush1.xpose.msra.mxu0 0.0
        %449 = vmatprep.subr.mxu0 0.0
        %450 = vmatpush1.xpose.msra.mxu0 0.0
        %451 = vmatprep.subr.mxu0 0.0
        %452 = vmatpush1.xpose.msra.mxu0 0.0
        %453 = vmatprep.subr.mxu0 0.0
        %454 = vmatpush1.xpose.msra.mxu0 0.0
        %455 = vmatprep.subr.mxu0 0.0
        %456 = vmatpush1.xpose.msra.mxu0 0.0
        %457 = vmatprep.subr.mxu0 0.0
        %458 = vmatpush1.xpose.msra.mxu0 0.0
        %459 = vmatprep.subr.mxu0 0.0
        %460 = vmatpush1.xpose.msra.mxu0 %v429
        %461 = vmatprep.subr.mxu0 0.0
        %462 = vmatpush1.xpose.msra.mxu0 %v426
        %463 = vmatprep.subr.mxu0 0.0
        %464 = vmatpush2.xpose.msra.mxu0 0.0
        %465 = vmatprep.subr.mxu0 0.0
        %466 = vmatpush2.xpose.msra.mxu0 0.0
        %467 = vmatprep.subr.mxu0 0.0
        %468 = vmatpush2.xpose.msra.mxu0 0.0
        %469 = vmatprep.subr.mxu0 0.0
        %470 = vmatpush2.xpose.msra.mxu0 0.0
        %471 = vmatprep.subr.mxu0 0.0
        %472 = vmatpush2.xpose.msra.mxu0 0.0
        %473 = vmatprep.subr.mxu0 0.0
        %474 = vmatpush2.xpose.msra.mxu0 0.0
        %475 = vmatprep.subr.mxu0 0.0
        %476 = vmatpush2.xpose.msra.mxu0 0.0
        %477 = vmatprep.subr.mxu0 0.0
        %478 = vmatpush2.xpose.msra.mxu0 0.0
        %479 = vmatprep.subr.mxu0 0.0
        %480 = vmatpush2.xpose.msra.mxu0 0.0
        %481 = vmatprep.subr.mxu0 0.0
        %482 = vmatpush2.xpose.msra.mxu0 0.0
        %483 = vmatprep.subr.mxu0 0.0
        %484 = vmatpush2.xpose.msra.mxu0 0.0
        %485 = vmatprep.subr.mxu0 0.0
        %486 = vmatpush2.xpose.msra.mxu0 0.0
        %487 = vmatprep.subr.mxu0 0.0
        %488 = vmatpush2.xpose.msra.mxu0 0.0
        %489 = vmatprep.subr.mxu0 0.0
        %490 = vmatpush2.xpose.msra.mxu0 0.0
        %491 = vmatprep.subr.mxu0 0.0
        %492 = vmatpush2.xpose.msra.mxu0 0.0
        %493 = vmatprep.subr.mxu0 0.0
        %494 = vmatpush2.xpose.msra.mxu0 0.0
        %495 = vmatprep.mubr.f32.mxu0 0.0
        %496 = vmatmul.mubr.f32.gmra.mxu0 %v402
        %v497 = vpop.f32.mrf.mxu0
        %v498 = vadd.f32 %v398, %v497
        %v499 = vpop.f32.mrf.mxu0
        %500 = vmatprep.mubr.f32.mxu0 0.0
        %501 = vmatmul.mubr.f32.gmra.mxu0 %v405
        %v502 = vpop.f32.mrf.mxu0
        %v503 = vadd.f32 %v398, %v502
        %v504 = vpop.f32.mrf.mxu0
        %505 = vmatprep.mubr.f32.mxu0 0.0
        %506 = vmatmul.mubr.f32.gmra.mxu0 %v408
        %v507 = vpop.f32.mrf.mxu0
        %v508 = vadd.f32 %v398, %v507
        %v509 = vpop.f32.mrf.mxu0
        %510 = vmatprep.mubr.f32.mxu0 0.0
        %511 = vmatmul.mubr.f32.gmra.mxu0 %v411
        %v512 = vpop.f32.mrf.mxu0
        %v513 = vadd.f32 %v398, %v512
        %v514 = vpop.f32.mrf.mxu0
        %515 = vmatprep.mubr.f32.mxu0 0.0
        %516 = vmatmul.mubr.f32.gmra.mxu0 %v414
        %v517 = vpop.f32.mrf.mxu0
        %v518 = vadd.f32 %v398, %v517
        %v519 = vpop.f32.mrf.mxu0
        %520 = vmatprep.mubr.f32.mxu0 0.0
        %521 = vmatmul.mubr.f32.gmra.mxu0 %v417
        %v522 = vpop.f32.mrf.mxu0
        %v523 = vadd.f32 %v398, %v522
        %v524 = vpop.f32.mrf.mxu0
        %525 = vmatprep.mubr.f32.mxu0 0.0
        %526 = vmatmul.mubr.f32.gmra.mxu0 %v420
        %v527 = vpop.f32.mrf.mxu0
        %v528 = vadd.f32 %v398, %v527
        %v529 = vpop.f32.mrf.mxu0
        %530 = vmatprep.mubr.f32.mxu0 0.0
        %531 = vmatmul.mubr.f32.gmra.mxu0 %v423
        %v532 = vpop.f32.mrf.mxu0
        %v533 = vadd.f32 %v398, %v532
        %v534 = vpop.f32.mrf.mxu0
        %535 = vdwg.mxu0
        %v536 = vmax.f32 %v498, 0.0
        %v537 = vmax.f32 %v503, 0.0
        %v538 = vmax.f32 %v508, 0.0
        %v539 = vmax.f32 %v513, 0.0
        %v540 = vmax.f32 %v518, 0.0
        %v541 = vmax.f32 %v523, 0.0
        %v542 = vmax.f32 %v528, 0.0
        %v543 = vmax.f32 %v533, 0.0
        %v544 = vld [vmem:[%s3] sm:$0xff]
        %v545 = vld [vmem:[%s3 + $0x8] sm:$0xff]
        %v546 = vld [vmem:[%s4] sm:$0x1]
        %v548 = vlaneseq
        %v549 = vshrl.u32 %v548, 7
        %v550 = vsub.s32 0, %v549
        %v551 = vrot.slane %v546, %v550
        %v554 = vsel %vm400, %v536, 0
        %v557 = vsel %vm400, %v537, 0
        %v560 = vsel %vm400, %v538, 0
        %v563 = vsel %vm400, %v539, 0
        %v566 = vsel %vm400, %v540, 0
        %v569 = vsel %vm400, %v541, 0
        %v572 = vsel %vm400, %v542, 0
        %v575 = vsel %vm400, %v543, 0
        %v578 = vsel %vm400, %v544, 0
        %v581 = vsel %vm400, %v545, 0
        %583 = vmatprep.subr.mxu0 0.0
        %584 = vmatpush1.xpose.msra.mxu0 0.0
        %585 = vmatprep.subr.mxu0 0.0
        %586 = vmatpush1.xpose.msra.mxu0 0.0
        %587 = vmatprep.subr.mxu0 0.0
        %588 = vmatpush1.xpose.msra.mxu0 0.0
        %589 = vmatprep.subr.mxu0 0.0
        %590 = vmatpush1.xpose.msra.mxu0 0.0
        %591 = vmatprep.subr.mxu0 0.0
        %592 = vmatpush1.xpose.msra.mxu0 0.0
        %593 = vmatprep.subr.mxu0 0.0
        %594 = vmatpush1.xpose.msra.mxu0 0.0
        %595 = vmatprep.subr.mxu0 0.0
        %596 = vmatpush1.xpose.msra.mxu0 0.0
        %597 = vmatprep.subr.mxu0 0.0
        %598 = vmatpush1.xpose.msra.mxu0 0.0
        %599 = vmatprep.subr.mxu0 0.0
        %600 = vmatpush1.xpose.msra.mxu0 0.0
        %601 = vmatprep.subr.mxu0 0.0
        %602 = vmatpush1.xpose.msra.mxu0 0.0
        %603 = vmatprep.subr.mxu0 0.0
        %604 = vmatpush1.xpose.msra.mxu0 0.0
        %605 = vmatprep.subr.mxu0 0.0
        %606 = vmatpush1.xpose.msra.mxu0 0.0
        %607 = vmatprep.subr.mxu0 0.0
        %608 = vmatpush1.xpose.msra.mxu0 0.0
        %609 = vmatprep.subr.mxu0 0.0
        %610 = vmatpush1.xpose.msra.mxu0 0.0
        %611 = vmatprep.subr.mxu0 0.0
        %612 = vmatpush1.xpose.msra.mxu0 %v581
        %613 = vmatprep.subr.mxu0 0.0
        %614 = vmatpush1.xpose.msra.mxu0 %v578
        %615 = vmatprep.subr.mxu0 0.0
        %616 = vmatpush2.xpose.msra.mxu0 0.0
        %617 = vmatprep.subr.mxu0 0.0
        %618 = vmatpush2.xpose.msra.mxu0 0.0
        %619 = vmatprep.subr.mxu0 0.0
        %620 = vmatpush2.xpose.msra.mxu0 0.0
        %621 = vmatprep.subr.mxu0 0.0
        %622 = vmatpush2.xpose.msra.mxu0 0.0
        %623 = vmatprep.subr.mxu0 0.0
        %624 = vmatpush2.xpose.msra.mxu0 0.0
        %625 = vmatprep.subr.mxu0 0.0
        %626 = vmatpush2.xpose.msra.mxu0 0.0
        %627 = vmatprep.subr.mxu0 0.0
        %628 = vmatpush2.xpose.msra.mxu0 0.0
        %629 = vmatprep.subr.mxu0 0.0
        %630 = vmatpush2.xpose.msra.mxu0 0.0
        %631 = vmatprep.subr.mxu0 0.0
        %632 = vmatpush2.xpose.msra.mxu0 0.0
        %633 = vmatprep.subr.mxu0 0.0
        %634 = vmatpush2.xpose.msra.mxu0 0.0
        %635 = vmatprep.subr.mxu0 0.0
        %636 = vmatpush2.xpose.msra.mxu0 0.0
        %637 = vmatprep.subr.mxu0 0.0
        %638 = vmatpush2.xpose.msra.mxu0 0.0
        %639 = vmatprep.subr.mxu0 0.0
        %640 = vmatpush2.xpose.msra.mxu0 0.0
        %641 = vmatprep.subr.mxu0 0.0
        %642 = vmatpush2.xpose.msra.mxu0 0.0
        %643 = vmatprep.subr.mxu0 0.0
        %644 = vmatpush2.xpose.msra.mxu0 0.0
        %645 = vmatprep.subr.mxu0 0.0
        %646 = vmatpush2.xpose.msra.mxu0 0.0
        %647 = vmatprep.mubr.f32.mxu0 0.0
        %648 = vmatmul.mubr.f32.gmra.mxu0 %v554
        %v649 = vpop.f32.mrf.mxu0
        %v650 = vadd.f32 %v551, %v649
        %v651 = vpop.f32.mrf.mxu0
        %652 = vmatprep.mubr.f32.mxu0 0.0
        %653 = vmatmul.mubr.f32.gmra.mxu0 %v557
        %v654 = vpop.f32.mrf.mxu0
        %v655 = vadd.f32 %v551, %v654
        %v656 = vpop.f32.mrf.mxu0
        %657 = vmatprep.mubr.f32.mxu0 0.0
        %658 = vmatmul.mubr.f32.gmra.mxu0 %v560
        %v659 = vpop.f32.mrf.mxu0
        %v660 = vadd.f32 %v551, %v659
        %v661 = vpop.f32.mrf.mxu0
        %662 = vmatprep.mubr.f32.mxu0 0.0
        %663 = vmatmul.mubr.f32.gmra.mxu0 %v563
        %v664 = vpop.f32.mrf.mxu0
        %v665 = vadd.f32 %v551, %v664
        %v666 = vpop.f32.mrf.mxu0
        %667 = vmatprep.mubr.f32.mxu0 0.0
        %668 = vmatmul.mubr.f32.gmra.mxu0 %v566
        %v669 = vpop.f32.mrf.mxu0
        %v670 = vadd.f32 %v551, %v669
        %v671 = vpop.f32.mrf.mxu0
        %672 = vmatprep.mubr.f32.mxu0 0.0
        %673 = vmatmul.mubr.f32.gmra.mxu0 %v569
        %v674 = vpop.f32.mrf.mxu0
        %v675 = vadd.f32 %v551, %v674
        %v676 = vpop.f32.mrf.mxu0
        %677 = vmatprep.mubr.f32.mxu0 0.0
        %678 = vmatmul.mubr.f32.gmra.mxu0 %v572
        %v679 = vpop.f32.mrf.mxu0
        %v680 = vadd.f32 %v551, %v679
        %v681 = vpop.f32.mrf.mxu0
        %682 = vmatprep.mubr.f32.mxu0 0.0
        %683 = vmatmul.mubr.f32.gmra.mxu0 %v575
        %v684 = vpop.f32.mrf.mxu0
        %v685 = vadd.f32 %v551, %v684
        %v686 = vpop.f32.mrf.mxu0
        %687 = vdwg.mxu0
        %v688 = vld [vmem:[#allocation5] sm:$0xff]
        %v689 = vld [vmem:[#allocation5 + $0x8] sm:$0xff]
        %v690 = vld [vmem:[#allocation7] sm:$0xff]
        %v691 = vld [vmem:[#allocation7 + $0x8] sm:$0xff]
        %v692 = vld [vmem:[%s6] sm:$0xff]
        %v693 = vld [vmem:[%s6 + $0x8] sm:$0xff]
        %v694 = vld [vmem:[%s8] sm:$0xff]
        %v695 = vld [vmem:[%s8 + $0x8] sm:$0xff]
        %697 = vset.pattern.permute.xlu0 0
        %698 = vperm.xlu0 %697, %v692
        %v699 = vpop.permute.xlu0 %698
        %702 = vset.pattern.permute.xlu0 0
        %703 = vperm.xlu0 %702, %v693
        %v704 = vpop.permute.xlu0 %703
        %v707 = vsel %vm400, %v688, 0
        %v710 = vsel %vm400, %v689, 0
        %712 = vmatprep.subr.mxu0 0.0
        %713 = vmatpush1.msra.mxu0 0.0
        %714 = vmatprep.subr.mxu0 0.0
        %715 = vmatpush1.msra.mxu0 0.0
        %716 = vmatprep.subr.mxu0 0.0
        %717 = vmatpush1.msra.mxu0 0.0
        %718 = vmatprep.subr.mxu0 0.0
        %719 = vmatpush1.msra.mxu0 0.0
        %720 = vmatprep.subr.mxu0 0.0
        %721 = vmatpush1.msra.mxu0 0.0
        %722 = vmatprep.subr.mxu0 0.0
        %723 = vmatpush1.msra.mxu0 0.0
        %724 = vmatprep.subr.mxu0 0.0
        %725 = vmatpush1.msra.mxu0 0.0
        %726 = vmatprep.subr.mxu0 0.0
        %727 = vmatpush1.msra.mxu0 0.0
        %728 = vmatprep.subr.mxu0 0.0
        %729 = vmatpush1.msra.mxu0 0.0
        %730 = vmatprep.subr.mxu0 0.0
        %731 = vmatpush1.msra.mxu0 0.0
        %732 = vmatprep.subr.mxu0 0.0
        %733 = vmatpush1.msra.mxu0 0.0
        %734 = vmatprep.subr.mxu0 0.0
        %735 = vmatpush1.msra.mxu0 0.0
        %736 = vmatprep.subr.mxu0 0.0
        %737 = vmatpush1.msra.mxu0 0.0
        %738 = vmatprep.subr.mxu0 0.0
        %739 = vmatpush1.msra.mxu0 0.0
        %740 = vmatprep.subr.mxu0 0.0
        %741 = vmatpush1.msra.mxu0 %v384
        %742 = vmatprep.subr.mxu0 0.0
        %743 = vmatpush1.msra.mxu0 %v383
        %744 = vmatprep.subr.mxu0 0.0
        %745 = vmatpush2.msra.mxu0 0.0
        %746 = vmatprep.subr.mxu0 0.0
        %747 = vmatpush2.msra.mxu0 0.0
        %748 = vmatprep.subr.mxu0 0.0
        %749 = vmatpush2.msra.mxu0 0.0
        %750 = vmatprep.subr.mxu0 0.0
        %751 = vmatpush2.msra.mxu0 0.0
        %752 = vmatprep.subr.mxu0 0.0
        %753 = vmatpush2.msra.mxu0 0.0
        %754 = vmatprep.subr.mxu0 0.0
        %755 = vmatpush2.msra.mxu0 0.0
        %756 = vmatprep.subr.mxu0 0.0
        %757 = vmatpush2.msra.mxu0 0.0
        %758 = vmatprep.subr.mxu0 0.0
        %759 = vmatpush2.msra.mxu0 0.0
        %760 = vmatprep.subr.mxu0 0.0
        %761 = vmatpush2.msra.mxu0 0.0
        %762 = vmatprep.subr.mxu0 0.0
        %763 = vmatpush2.msra.mxu0 0.0
        %764 = vmatprep.subr.mxu0 0.0
        %765 = vmatpush2.msra.mxu0 0.0
        %766 = vmatprep.subr.mxu0 0.0
        %767 = vmatpush2.msra.mxu0 0.0
        %768 = vmatprep.subr.mxu0 0.0
        %769 = vmatpush2.msra.mxu0 0.0
        %770 = vmatprep.subr.mxu0 0.0
        %771 = vmatpush2.msra.mxu0 0.0
        %772 = vmatprep.subr.mxu0 0.0
        %773 = vmatpush2.msra.mxu0 0.0
        %774 = vmatprep.subr.mxu0 0.0
        %775 = vmatpush2.msra.mxu0 0.0
        %776 = vmatprep.mubr.f32.mxu0 0.0
        %777 = vmatmul.mubr.f32.gmra.mxu0 %v707
        %v778 = vpop.f32.mrf.mxu0
        %v779 = vadd.f32 %v699, %v778
        %v780 = vpop.f32.mrf.mxu0
        %781 = vmatprep.mubr.f32.mxu0 0.0
        %782 = vmatmul.mubr.f32.gmra.mxu0 %v710
        %v783 = vpop.f32.mrf.mxu0
        %v784 = vadd.f32 %v704, %v783
        %v785 = vpop.f32.mrf.mxu0
        %786 = vdwg.mxu0
        %787 = vmatprep.subr.mxu0 0.0
        %788 = vmatpush1.msra.mxu0 0.0
        %789 = vmatprep.subr.mxu0 0.0
        %790 = vmatpush1.msra.mxu0 0.0
        %791 = vmatprep.subr.mxu0 0.0
        %792 = vmatpush1.msra.mxu0 0.0
        %793 = vmatprep.subr.mxu0 0.0
        %794 = vmatpush1.msra.mxu0 0.0
        %795 = vmatprep.subr.mxu0 0.0
        %796 = vmatpush1.msra.mxu0 0.0
        %797 = vmatprep.subr.mxu0 0.0
        %798 = vmatpush1.msra.mxu0 0.0
        %799 = vmatprep.subr.mxu0 0.0
        %800 = vmatpush1.msra.mxu0 0.0
        %801 = vmatprep.subr.mxu0 0.0
        %802 = vmatpush1.msra.mxu0 0.0
        %803 = vmatprep.subr.mxu0 0.0
        %804 = vmatpush1.msra.mxu0 0.0
        %805 = vmatprep.subr.mxu0 0.0
        %806 = vmatpush1.msra.mxu0 0.0
        %807 = vmatprep.subr.mxu0 0.0
        %808 = vmatpush1.msra.mxu0 0.0
        %809 = vmatprep.subr.mxu0 0.0
        %810 = vmatpush1.msra.mxu0 0.0
        %811 = vmatprep.subr.mxu0 0.0
        %812 = vmatpush1.msra.mxu0 0.0
        %813 = vmatprep.subr.mxu0 0.0
        %814 = vmatpush1.msra.mxu0 0.0
        %815 = vmatprep.subr.mxu0 0.0
        %816 = vmatpush1.msra.mxu0 %v386
        %817 = vmatprep.subr.mxu0 0.0
        %818 = vmatpush1.msra.mxu0 %v385
        %819 = vmatprep.subr.mxu0 0.0
        %820 = vmatpush2.msra.mxu0 0.0
        %821 = vmatprep.subr.mxu0 0.0
        %822 = vmatpush2.msra.mxu0 0.0
        %823 = vmatprep.subr.mxu0 0.0
        %824 = vmatpush2.msra.mxu0 0.0
        %825 = vmatprep.subr.mxu0 0.0
        %826 = vmatpush2.msra.mxu0 0.0
        %827 = vmatprep.subr.mxu0 0.0
        %828 = vmatpush2.msra.mxu0 0.0
        %829 = vmatprep.subr.mxu0 0.0
        %830 = vmatpush2.msra.mxu0 0.0
        %831 = vmatprep.subr.mxu0 0.0
        %832 = vmatpush2.msra.mxu0 0.0
        %833 = vmatprep.subr.mxu0 0.0
        %834 = vmatpush2.msra.mxu0 0.0
        %835 = vmatprep.subr.mxu0 0.0
        %836 = vmatpush2.msra.mxu0 0.0
        %837 = vmatprep.subr.mxu0 0.0
        %838 = vmatpush2.msra.mxu0 0.0
        %839 = vmatprep.subr.mxu0 0.0
        %840 = vmatpush2.msra.mxu0 0.0
        %841 = vmatprep.subr.mxu0 0.0
        %842 = vmatpush2.msra.mxu0 0.0
        %843 = vmatprep.subr.mxu0 0.0
        %844 = vmatpush2.msra.mxu0 0.0
        %845 = vmatprep.subr.mxu0 0.0
        %846 = vmatpush2.msra.mxu0 0.0
        %847 = vmatprep.subr.mxu0 0.0
        %848 = vmatpush2.msra.mxu0 0.0
        %849 = vmatprep.subr.mxu0 0.0
        %850 = vmatpush2.msra.mxu0 0.0
        %851 = vmatprep.mubr.f32.mxu0 0.0
        %852 = vmatmul.mubr.f32.gmra.mxu0 %v707
        %v853 = vpop.f32.mrf.mxu0
        %v854 = vadd.f32 %v699, %v853
        %v855 = vpop.f32.mrf.mxu0
        %856 = vmatprep.mubr.f32.mxu0 0.0
        %857 = vmatmul.mubr.f32.gmra.mxu0 %v710
        %v858 = vpop.f32.mrf.mxu0
        %v859 = vadd.f32 %v704, %v858
        %v860 = vpop.f32.mrf.mxu0
        %861 = vdwg.mxu0
        %862 = vmatprep.subr.mxu0 0.0
        %863 = vmatpush1.msra.mxu0 0.0
        %864 = vmatprep.subr.mxu0 0.0
        %865 = vmatpush1.msra.mxu0 0.0
        %866 = vmatprep.subr.mxu0 0.0
        %867 = vmatpush1.msra.mxu0 0.0
        %868 = vmatprep.subr.mxu0 0.0
        %869 = vmatpush1.msra.mxu0 0.0
        %870 = vmatprep.subr.mxu0 0.0
        %871 = vmatpush1.msra.mxu0 0.0
        %872 = vmatprep.subr.mxu0 0.0
        %873 = vmatpush1.msra.mxu0 0.0
        %874 = vmatprep.subr.mxu0 0.0
        %875 = vmatpush1.msra.mxu0 0.0
        %876 = vmatprep.subr.mxu0 0.0
        %877 = vmatpush1.msra.mxu0 0.0
        %878 = vmatprep.subr.mxu0 0.0
        %879 = vmatpush1.msra.mxu0 0.0
        %880 = vmatprep.subr.mxu0 0.0
        %881 = vmatpush1.msra.mxu0 0.0
        %882 = vmatprep.subr.mxu0 0.0
        %883 = vmatpush1.msra.mxu0 0.0
        %884 = vmatprep.subr.mxu0 0.0
        %885 = vmatpush1.msra.mxu0 0.0
        %886 = vmatprep.subr.mxu0 0.0
        %887 = vmatpush1.msra.mxu0 0.0
        %888 = vmatprep.subr.mxu0 0.0
        %889 = vmatpush1.msra.mxu0 0.0
        %890 = vmatprep.subr.mxu0 0.0
        %891 = vmatpush1.msra.mxu0 %v388
        %892 = vmatprep.subr.mxu0 0.0
        %893 = vmatpush1.msra.mxu0 %v387
        %894 = vmatprep.subr.mxu0 0.0
        %895 = vmatpush2.msra.mxu0 0.0
        %896 = vmatprep.subr.mxu0 0.0
        %897 = vmatpush2.msra.mxu0 0.0
        %898 = vmatprep.subr.mxu0 0.0
        %899 = vmatpush2.msra.mxu0 0.0
        %900 = vmatprep.subr.mxu0 0.0
        %901 = vmatpush2.msra.mxu0 0.0
        %902 = vmatprep.subr.mxu0 0.0
        %903 = vmatpush2.msra.mxu0 0.0
        %904 = vmatprep.subr.mxu0 0.0
        %905 = vmatpush2.msra.mxu0 0.0
        %906 = vmatprep.subr.mxu0 0.0
        %907 = vmatpush2.msra.mxu0 0.0
        %908 = vmatprep.subr.mxu0 0.0
        %909 = vmatpush2.msra.mxu0 0.0
        %910 = vmatprep.subr.mxu0 0.0
        %911 = vmatpush2.msra.mxu0 0.0
        %912 = vmatprep.subr.mxu0 0.0
        %913 = vmatpush2.msra.mxu0 0.0
        %914 = vmatprep.subr.mxu0 0.0
        %915 = vmatpush2.msra.mxu0 0.0
        %916 = vmatprep.subr.mxu0 0.0
        %917 = vmatpush2.msra.mxu0 0.0
        %918 = vmatprep.subr.mxu0 0.0
        %919 = vmatpush2.msra.mxu0 0.0
        %920 = vmatprep.subr.mxu0 0.0
        %921 = vmatpush2.msra.mxu0 0.0
        %922 = vmatprep.subr.mxu0 0.0
        %923 = vmatpush2.msra.mxu0 0.0
        %924 = vmatprep.subr.mxu0 0.0
        %925 = vmatpush2.msra.mxu0 0.0
        %926 = vmatprep.mubr.f32.mxu0 0.0
        %927 = vmatmul.mubr.f32.gmra.mxu0 %v707
        %v928 = vpop.f32.mrf.mxu0
        %v929 = vadd.f32 %v699, %v928
        %v930 = vpop.f32.mrf.mxu0
        %931 = vmatprep.mubr.f32.mxu0 0.0
        %932 = vmatmul.mubr.f32.gmra.mxu0 %v710
        %v933 = vpop.f32.mrf.mxu0
        %v934 = vadd.f32 %v704, %v933
        %v935 = vpop.f32.mrf.mxu0
        %936 = vdwg.mxu0
        %937 = vmatprep.subr.mxu0 0.0
        %938 = vmatpush1.msra.mxu0 0.0
        %939 = vmatprep.subr.mxu0 0.0
        %940 = vmatpush1.msra.mxu0 0.0
        %941 = vmatprep.subr.mxu0 0.0
        %942 = vmatpush1.msra.mxu0 0.0
        %943 = vmatprep.subr.mxu0 0.0
        %944 = vmatpush1.msra.mxu0 0.0
        %945 = vmatprep.subr.mxu0 0.0
        %946 = vmatpush1.msra.mxu0 0.0
        %947 = vmatprep.subr.mxu0 0.0
        %948 = vmatpush1.msra.mxu0 0.0
        %949 = vmatprep.subr.mxu0 0.0
        %950 = vmatpush1.msra.mxu0 0.0
        %951 = vmatprep.subr.mxu0 0.0
        %952 = vmatpush1.msra.mxu0 0.0
        %953 = vmatprep.subr.mxu0 0.0
        %954 = vmatpush1.msra.mxu0 0.0
        %955 = vmatprep.subr.mxu0 0.0
        %956 = vmatpush1.msra.mxu0 0.0
        %957 = vmatprep.subr.mxu0 0.0
        %958 = vmatpush1.msra.mxu0 0.0
        %959 = vmatprep.subr.mxu0 0.0
        %960 = vmatpush1.msra.mxu0 0.0
        %961 = vmatprep.subr.mxu0 0.0
        %962 = vmatpush1.msra.mxu0 0.0
        %963 = vmatprep.subr.mxu0 0.0
        %964 = vmatpush1.msra.mxu0 0.0
        %965 = vmatprep.subr.mxu0 0.0
        %966 = vmatpush1.msra.mxu0 %v390
        %967 = vmatprep.subr.mxu0 0.0
        %968 = vmatpush1.msra.mxu0 %v389
        %969 = vmatprep.subr.mxu0 0.0
        %970 = vmatpush2.msra.mxu0 0.0
        %971 = vmatprep.subr.mxu0 0.0
        %972 = vmatpush2.msra.mxu0 0.0
        %973 = vmatprep.subr.mxu0 0.0
        %974 = vmatpush2.msra.mxu0 0.0
        %975 = vmatprep.subr.mxu0 0.0
        %976 = vmatpush2.msra.mxu0 0.0
        %977 = vmatprep.subr.mxu0 0.0
        %978 = vmatpush2.msra.mxu0 0.0
        %979 = vmatprep.subr.mxu0 0.0
        %980 = vmatpush2.msra.mxu0 0.0
        %981 = vmatprep.subr.mxu0 0.0
        %982 = vmatpush2.msra.mxu0 0.0
        %983 = vmatprep.subr.mxu0 0.0
        %984 = vmatpush2.msra.mxu0 0.0
        %985 = vmatprep.subr.mxu0 0.0
        %986 = vmatpush2.msra.mxu0 0.0
        %987 = vmatprep.subr.mxu0 0.0
        %988 = vmatpush2.msra.mxu0 0.0
        %989 = vmatprep.subr.mxu0 0.0
        %990 = vmatpush2.msra.mxu0 0.0
        %991 = vmatprep.subr.mxu0 0.0
        %992 = vmatpush2.msra.mxu0 0.0
        %993 = vmatprep.subr.mxu0 0.0
        %994 = vmatpush2.msra.mxu0 0.0
        %995 = vmatprep.subr.mxu0 0.0
        %996 = vmatpush2.msra.mxu0 0.0
        %997 = vmatprep.subr.mxu0 0.0
        %998 = vmatpush2.msra.mxu0 0.0
        %999 = vmatprep.subr.mxu0 0.0
        %1000 = vmatpush2.msra.mxu0 0.0
        %1001 = vmatprep.mubr.f32.mxu0 0.0
        %1002 = vmatmul.mubr.f32.gmra.mxu0 %v707
        %v1003 = vpop.f32.mrf.mxu0
        %v1004 = vadd.f32 %v699, %v1003
        %v1005 = vpop.f32.mrf.mxu0
        %1006 = vmatprep.mubr.f32.mxu0 0.0
        %1007 = vmatmul.mubr.f32.gmra.mxu0 %v710
        %v1008 = vpop.f32.mrf.mxu0
        %v1009 = vadd.f32 %v704, %v1008
        %v1010 = vpop.f32.mrf.mxu0
        %1011 = vdwg.mxu0
        %v1012 = vmax.f32 %v779, 0.0
        %v1013 = vmax.f32 %v784, 0.0
        %v1014 = vmax.f32 %v854, 0.0
        %v1015 = vmax.f32 %v859, 0.0
        %v1016 = vmax.f32 %v929, 0.0
        %v1017 = vmax.f32 %v934, 0.0
        %v1018 = vmax.f32 %v1004, 0.0
        %v1019 = vmax.f32 %v1009, 0.0
        %1021 = vset.pattern.permute.xlu0 0
        %1022 = vperm.xlu0 %1021, %v694
        %v1023 = vpop.permute.xlu0 %1022
        %1026 = vset.pattern.permute.xlu0 0
        %1027 = vperm.xlu0 %1026, %v695
        %v1028 = vpop.permute.xlu0 %1027
        %v1031 = vsel %vm400, %v690, 0
        %v1034 = vsel %vm400, %v691, 0
        %1036 = vmatprep.subr.mxu0 0.0
        %1037 = vmatpush1.msra.mxu0 0.0
        %1038 = vmatprep.subr.mxu0 0.0
        %1039 = vmatpush1.msra.mxu0 0.0
        %1040 = vmatprep.subr.mxu0 0.0
        %1041 = vmatpush1.msra.mxu0 0.0
        %1042 = vmatprep.subr.mxu0 0.0
        %1043 = vmatpush1.msra.mxu0 0.0
        %1044 = vmatprep.subr.mxu0 0.0
        %1045 = vmatpush1.msra.mxu0 0.0
        %1046 = vmatprep.subr.mxu0 0.0
        %1047 = vmatpush1.msra.mxu0 0.0
        %1048 = vmatprep.subr.mxu0 0.0
        %1049 = vmatpush1.msra.mxu0 0.0
        %1050 = vmatprep.subr.mxu0 0.0
        %1051 = vmatpush1.msra.mxu0 0.0
        %1052 = vmatprep.subr.mxu0 0.0
        %1053 = vmatpush1.msra.mxu0 0.0
        %1054 = vmatprep.subr.mxu0 0.0
        %1055 = vmatpush1.msra.mxu0 0.0
        %1056 = vmatprep.subr.mxu0 0.0
        %1057 = vmatpush1.msra.mxu0 0.0
        %1058 = vmatprep.subr.mxu0 0.0
        %1059 = vmatpush1.msra.mxu0 0.0
        %1060 = vmatprep.subr.mxu0 0.0
        %1061 = vmatpush1.msra.mxu0 0.0
        %1062 = vmatprep.subr.mxu0 0.0
        %1063 = vmatpush1.msra.mxu0 0.0
        %1064 = vmatprep.subr.mxu0 0.0
        %1065 = vmatpush1.msra.mxu0 %v1013
        %1066 = vmatprep.subr.mxu0 0.0
        %1067 = vmatpush1.msra.mxu0 %v1012
        %1068 = vmatprep.subr.mxu0 0.0
        %1069 = vmatpush2.msra.mxu0 0.0
        %1070 = vmatprep.subr.mxu0 0.0
        %1071 = vmatpush2.msra.mxu0 0.0
        %1072 = vmatprep.subr.mxu0 0.0
        %1073 = vmatpush2.msra.mxu0 0.0
        %1074 = vmatprep.subr.mxu0 0.0
        %1075 = vmatpush2.msra.mxu0 0.0
        %1076 = vmatprep.subr.mxu0 0.0
        %1077 = vmatpush2.msra.mxu0 0.0
        %1078 = vmatprep.subr.mxu0 0.0
        %1079 = vmatpush2.msra.mxu0 0.0
        %1080 = vmatprep.subr.mxu0 0.0
        %1081 = vmatpush2.msra.mxu0 0.0
        %1082 = vmatprep.subr.mxu0 0.0
        %1083 = vmatpush2.msra.mxu0 0.0
        %1084 = vmatprep.subr.mxu0 0.0
        %1085 = vmatpush2.msra.mxu0 0.0
        %1086 = vmatprep.subr.mxu0 0.0
        %1087 = vmatpush2.msra.mxu0 0.0
        %1088 = vmatprep.subr.mxu0 0.0
        %1089 = vmatpush2.msra.mxu0 0.0
        %1090 = vmatprep.subr.mxu0 0.0
        %1091 = vmatpush2.msra.mxu0 0.0
        %1092 = vmatprep.subr.mxu0 0.0
        %1093 = vmatpush2.msra.mxu0 0.0
        %1094 = vmatprep.subr.mxu0 0.0
        %1095 = vmatpush2.msra.mxu0 0.0
        %1096 = vmatprep.subr.mxu0 0.0
        %1097 = vmatpush2.msra.mxu0 0.0
        %1098 = vmatprep.subr.mxu0 0.0
        %1099 = vmatpush2.msra.mxu0 0.0
        %1100 = vmatprep.mubr.f32.mxu0 0.0
        %1101 = vmatmul.mubr.f32.gmra.mxu0 %v1031
        %v1102 = vpop.f32.mrf.mxu0
        %v1103 = vadd.f32 %v1023, %v1102
        %v1104 = vpop.f32.mrf.mxu0
        %1105 = vmatprep.mubr.f32.mxu0 0.0
        %1106 = vmatmul.mubr.f32.gmra.mxu0 %v1034
        %v1107 = vpop.f32.mrf.mxu0
        %v1108 = vadd.f32 %v1028, %v1107
        %v1109 = vpop.f32.mrf.mxu0
        %1110 = vdwg.mxu0
        %1111 = vmatprep.subr.mxu0 0.0
        %1112 = vmatpush1.msra.mxu0 0.0
        %1113 = vmatprep.subr.mxu0 0.0
        %1114 = vmatpush1.msra.mxu0 0.0
        %1115 = vmatprep.subr.mxu0 0.0
        %1116 = vmatpush1.msra.mxu0 0.0
        %1117 = vmatprep.subr.mxu0 0.0
        %1118 = vmatpush1.msra.mxu0 0.0
        %1119 = vmatprep.subr.mxu0 0.0
        %1120 = vmatpush1.msra.mxu0 0.0
        %1121 = vmatprep.subr.mxu0 0.0
        %1122 = vmatpush1.msra.mxu0 0.0
        %1123 = vmatprep.subr.mxu0 0.0
        %1124 = vmatpush1.msra.mxu0 0.0
        %1125 = vmatprep.subr.mxu0 0.0
        %1126 = vmatpush1.msra.mxu0 0.0
        %1127 = vmatprep.subr.mxu0 0.0
        %1128 = vmatpush1.msra.mxu0 0.0
        %1129 = vmatprep.subr.mxu0 0.0
        %1130 = vmatpush1.msra.mxu0 0.0
        %1131 = vmatprep.subr.mxu0 0.0
        %1132 = vmatpush1.msra.mxu0 0.0
        %1133 = vmatprep.subr.mxu0 0.0
        %1134 = vmatpush1.msra.mxu0 0.0
        %1135 = vmatprep.subr.mxu0 0.0
        %1136 = vmatpush1.msra.mxu0 0.0
        %1137 = vmatprep.subr.mxu0 0.0
        %1138 = vmatpush1.msra.mxu0 0.0
        %1139 = vmatprep.subr.mxu0 0.0
        %1140 = vmatpush1.msra.mxu0 %v1015
        %1141 = vmatprep.subr.mxu0 0.0
        %1142 = vmatpush1.msra.mxu0 %v1014
        %1143 = vmatprep.subr.mxu0 0.0
        %1144 = vmatpush2.msra.mxu0 0.0
        %1145 = vmatprep.subr.mxu0 0.0
        %1146 = vmatpush2.msra.mxu0 0.0
        %1147 = vmatprep.subr.mxu0 0.0
        %1148 = vmatpush2.msra.mxu0 0.0
        %1149 = vmatprep.subr.mxu0 0.0
        %1150 = vmatpush2.msra.mxu0 0.0
        %1151 = vmatprep.subr.mxu0 0.0
        %1152 = vmatpush2.msra.mxu0 0.0
        %1153 = vmatprep.subr.mxu0 0.0
        %1154 = vmatpush2.msra.mxu0 0.0
        %1155 = vmatprep.subr.mxu0 0.0
        %1156 = vmatpush2.msra.mxu0 0.0
        %1157 = vmatprep.subr.mxu0 0.0
        %1158 = vmatpush2.msra.mxu0 0.0
        %1159 = vmatprep.subr.mxu0 0.0
        %1160 = vmatpush2.msra.mxu0 0.0
        %1161 = vmatprep.subr.mxu0 0.0
        %1162 = vmatpush2.msra.mxu0 0.0
        %1163 = vmatprep.subr.mxu0 0.0
        %1164 = vmatpush2.msra.mxu0 0.0
        %1165 = vmatprep.subr.mxu0 0.0
        %1166 = vmatpush2.msra.mxu0 0.0
        %1167 = vmatprep.subr.mxu0 0.0
        %1168 = vmatpush2.msra.mxu0 0.0
        %1169 = vmatprep.subr.mxu0 0.0
        %1170 = vmatpush2.msra.mxu0 0.0
        %1171 = vmatprep.subr.mxu0 0.0
        %1172 = vmatpush2.msra.mxu0 0.0
        %1173 = vmatprep.subr.mxu0 0.0
        %1174 = vmatpush2.msra.mxu0 0.0
        %1175 = vmatprep.mubr.f32.mxu0 0.0
        %1176 = vmatmul.mubr.f32.gmra.mxu0 %v1031
        %v1177 = vpop.f32.mrf.mxu0
        %v1178 = vadd.f32 %v1023, %v1177
        %v1179 = vpop.f32.mrf.mxu0
        %1180 = vmatprep.mubr.f32.mxu0 0.0
        %1181 = vmatmul.mubr.f32.gmra.mxu0 %v1034
        %v1182 = vpop.f32.mrf.mxu0
        %v1183 = vadd.f32 %v1028, %v1182
        %v1184 = vpop.f32.mrf.mxu0
        %1185 = vdwg.mxu0
        %1186 = vmatprep.subr.mxu0 0.0
        %1187 = vmatpush1.msra.mxu0 0.0
        %1188 = vmatprep.subr.mxu0 0.0
        %1189 = vmatpush1.msra.mxu0 0.0
        %1190 = vmatprep.subr.mxu0 0.0
        %1191 = vmatpush1.msra.mxu0 0.0
        %1192 = vmatprep.subr.mxu0 0.0
        %1193 = vmatpush1.msra.mxu0 0.0
        %1194 = vmatprep.subr.mxu0 0.0
        %1195 = vmatpush1.msra.mxu0 0.0
        %1196 = vmatprep.subr.mxu0 0.0
        %1197 = vmatpush1.msra.mxu0 0.0
        %1198 = vmatprep.subr.mxu0 0.0
        %1199 = vmatpush1.msra.mxu0 0.0
        %1200 = vmatprep.subr.mxu0 0.0
        %1201 = vmatpush1.msra.mxu0 0.0
        %1202 = vmatprep.subr.mxu0 0.0
        %1203 = vmatpush1.msra.mxu0 0.0
        %1204 = vmatprep.subr.mxu0 0.0
        %1205 = vmatpush1.msra.mxu0 0.0
        %1206 = vmatprep.subr.mxu0 0.0
        %1207 = vmatpush1.msra.mxu0 0.0
        %1208 = vmatprep.subr.mxu0 0.0
        %1209 = vmatpush1.msra.mxu0 0.0
        %1210 = vmatprep.subr.mxu0 0.0
        %1211 = vmatpush1.msra.mxu0 0.0
        %1212 = vmatprep.subr.mxu0 0.0
        %1213 = vmatpush1.msra.mxu0 0.0
        %1214 = vmatprep.subr.mxu0 0.0
        %1215 = vmatpush1.msra.mxu0 %v1017
        %1216 = vmatprep.subr.mxu0 0.0
        %1217 = vmatpush1.msra.mxu0 %v1016
        %1218 = vmatprep.subr.mxu0 0.0
        %1219 = vmatpush2.msra.mxu0 0.0
        %1220 = vmatprep.subr.mxu0 0.0
        %1221 = vmatpush2.msra.mxu0 0.0
        %1222 = vmatprep.subr.mxu0 0.0
        %1223 = vmatpush2.msra.mxu0 0.0
        %1224 = vmatprep.subr.mxu0 0.0
        %1225 = vmatpush2.msra.mxu0 0.0
        %1226 = vmatprep.subr.mxu0 0.0
        %1227 = vmatpush2.msra.mxu0 0.0
        %1228 = vmatprep.subr.mxu0 0.0
        %1229 = vmatpush2.msra.mxu0 0.0
        %1230 = vmatprep.subr.mxu0 0.0
        %1231 = vmatpush2.msra.mxu0 0.0
        %1232 = vmatprep.subr.mxu0 0.0
        %1233 = vmatpush2.msra.mxu0 0.0
        %1234 = vmatprep.subr.mxu0 0.0
        %1235 = vmatpush2.msra.mxu0 0.0
        %1236 = vmatprep.subr.mxu0 0.0
        %1237 = vmatpush2.msra.mxu0 0.0
        %1238 = vmatprep.subr.mxu0 0.0
        %1239 = vmatpush2.msra.mxu0 0.0
        %1240 = vmatprep.subr.mxu0 0.0
        %1241 = vmatpush2.msra.mxu0 0.0
        %1242 = vmatprep.subr.mxu0 0.0
        %1243 = vmatpush2.msra.mxu0 0.0
        %1244 = vmatprep.subr.mxu0 0.0
        %1245 = vmatpush2.msra.mxu0 0.0
        %1246 = vmatprep.subr.mxu0 0.0
        %1247 = vmatpush2.msra.mxu0 0.0
        %1248 = vmatprep.subr.mxu0 0.0
        %1249 = vmatpush2.msra.mxu0 0.0
        %1250 = vmatprep.mubr.f32.mxu0 0.0
        %1251 = vmatmul.mubr.f32.gmra.mxu0 %v1031
        %v1252 = vpop.f32.mrf.mxu0
        %v1253 = vadd.f32 %v1023, %v1252
        %v1254 = vpop.f32.mrf.mxu0
        %1255 = vmatprep.mubr.f32.mxu0 0.0
        %1256 = vmatmul.mubr.f32.gmra.mxu0 %v1034
        %v1257 = vpop.f32.mrf.mxu0
        %v1258 = vadd.f32 %v1028, %v1257
        %v1259 = vpop.f32.mrf.mxu0
        %1260 = vdwg.mxu0
        %1261 = vmatprep.subr.mxu0 0.0
        %1262 = vmatpush1.msra.mxu0 0.0
        %1263 = vmatprep.subr.mxu0 0.0
        %1264 = vmatpush1.msra.mxu0 0.0
        %1265 = vmatprep.subr.mxu0 0.0
        %1266 = vmatpush1.msra.mxu0 0.0
        %1267 = vmatprep.subr.mxu0 0.0
        %1268 = vmatpush1.msra.mxu0 0.0
        %1269 = vmatprep.subr.mxu0 0.0
        %1270 = vmatpush1.msra.mxu0 0.0
        %1271 = vmatprep.subr.mxu0 0.0
        %1272 = vmatpush1.msra.mxu0 0.0
        %1273 = vmatprep.subr.mxu0 0.0
        %1274 = vmatpush1.msra.mxu0 0.0
        %1275 = vmatprep.subr.mxu0 0.0
        %1276 = vmatpush1.msra.mxu0 0.0
        %1277 = vmatprep.subr.mxu0 0.0
        %1278 = vmatpush1.msra.mxu0 0.0
        %1279 = vmatprep.subr.mxu0 0.0
        %1280 = vmatpush1.msra.mxu0 0.0
        %1281 = vmatprep.subr.mxu0 0.0
        %1282 = vmatpush1.msra.mxu0 0.0
        %1283 = vmatprep.subr.mxu0 0.0
        %1284 = vmatpush1.msra.mxu0 0.0
        %1285 = vmatprep.subr.mxu0 0.0
        %1286 = vmatpush1.msra.mxu0 0.0
        %1287 = vmatprep.subr.mxu0 0.0
        %1288 = vmatpush1.msra.mxu0 0.0
        %1289 = vmatprep.subr.mxu0 0.0
        %1290 = vmatpush1.msra.mxu0 %v1019
        %1291 = vmatprep.subr.mxu0 0.0
        %1292 = vmatpush1.msra.mxu0 %v1018
        %1293 = vmatprep.subr.mxu0 0.0
        %1294 = vmatpush2.msra.mxu0 0.0
        %1295 = vmatprep.subr.mxu0 0.0
        %1296 = vmatpush2.msra.mxu0 0.0
        %1297 = vmatprep.subr.mxu0 0.0
        %1298 = vmatpush2.msra.mxu0 0.0
        %1299 = vmatprep.subr.mxu0 0.0
        %1300 = vmatpush2.msra.mxu0 0.0
        %1301 = vmatprep.subr.mxu0 0.0
        %1302 = vmatpush2.msra.mxu0 0.0
        %1303 = vmatprep.subr.mxu0 0.0
        %1304 = vmatpush2.msra.mxu0 0.0
        %1305 = vmatprep.subr.mxu0 0.0
        %1306 = vmatpush2.msra.mxu0 0.0
        %1307 = vmatprep.subr.mxu0 0.0
        %1308 = vmatpush2.msra.mxu0 0.0
        %1309 = vmatprep.subr.mxu0 0.0
        %1310 = vmatpush2.msra.mxu0 0.0
        %1311 = vmatprep.subr.mxu0 0.0
        %1312 = vmatpush2.msra.mxu0 0.0
        %1313 = vmatprep.subr.mxu0 0.0
        %1314 = vmatpush2.msra.mxu0 0.0
        %1315 = vmatprep.subr.mxu0 0.0
        %1316 = vmatpush2.msra.mxu0 0.0
        %1317 = vmatprep.subr.mxu0 0.0
        %1318 = vmatpush2.msra.mxu0 0.0
        %1319 = vmatprep.subr.mxu0 0.0
        %1320 = vmatpush2.msra.mxu0 0.0
        %1321 = vmatprep.subr.mxu0 0.0
        %1322 = vmatpush2.msra.mxu0 0.0
        %1323 = vmatprep.subr.mxu0 0.0
        %1324 = vmatpush2.msra.mxu0 0.0
        %1325 = vmatprep.mubr.f32.mxu0 0.0
        %1326 = vmatmul.mubr.f32.gmra.mxu0 %v1031
        %v1327 = vpop.f32.mrf.mxu0
        %v1328 = vadd.f32 %v1023, %v1327
        %v1329 = vpop.f32.mrf.mxu0
        %1330 = vmatprep.mubr.f32.mxu0 0.0
        %1331 = vmatmul.mubr.f32.gmra.mxu0 %v1034
        %v1332 = vpop.f32.mrf.mxu0
        %v1333 = vadd.f32 %v1028, %v1332
        %v1334 = vpop.f32.mrf.mxu0
        %1335 = vdwg.mxu0
        %v1336 = vadd.f32 %v650, %v1103
        %v1337 = vadd.f32 %v655, %v1108
        %v1338 = vadd.f32 %v660, %v1178
        %v1339 = vadd.f32 %v665, %v1183
        %v1340 = vadd.f32 %v670, %v1253
        %v1341 = vadd.f32 %v675, %v1258
        %v1342 = vadd.f32 %v680, %v1328
        %v1343 = vadd.f32 %v685, %v1333
        %1344 = vst.msk [vmem:[%s380] sm:$0xff] %vm400, %v1336
        %1345 = vst.msk [vmem:[%s380 + $0x8] sm:$0xff] %vm400, %v1337
        %1346 = vst.msk [vmem:[%s380 + $0x10] sm:$0xff] %vm400, %v1338
        %1347 = vst.msk [vmem:[%s380 + $0x18] sm:$0xff] %vm400, %v1339
        %1348 = vst.msk [vmem:[%s380 + $0x20] sm:$0xff] %vm400, %v1340
        %1349 = vst.msk [vmem:[%s380 + $0x28] sm:$0xff] %vm400, %v1341
        %1350 = vst.msk [vmem:[%s380 + $0x30] sm:$0xff] %vm400, %v1342
        %1351 = vst.msk [vmem:[%s380 + $0x38] sm:$0xff] %vm400, %v1343
        %s1352 = sand.u32 %s229, 1
        %s1353 = scalar_lea.sflag [#allocation4], %s1352
        %s1354 = sand.u32 %s229, 1
        %s1355 = smul.addr %s1354, 64
        %s1356 = scalar_lea.vmem [#allocation8], %s1355
        // Predicated region
        $region69: #{tpu_custom_call.1} parent=55 // pred_check
          %p1357 = pneg %p239
        $region70: #{tpu_custom_call.1} parent=55 // pred_check_branch
          %1359 = sbr.rel (%p1357) target = $region72
        $region71: #{tpu_custom_call.1} parent=55 // pred_region
          %s1360 = smul.u32 4, %s27
          %s1362 = ssub.s32 1024, 1024
          %1363 = vsyncadd %s1353, %s1362
          %s1364 = smul.addr %s1360, 2
          %s1365 = smul.addr %s1364, 128
          %s1366 = scalar_lea.hbm %s9, %s1365
          %s1367 = sshll.u32 %s1356, 4
          %s1368 = int_to_ptr.vmem [resolvable:$true] %s1367
          %1373 = dma.vmem_to_hbm [thread:$0]  %s1368, 1024, %s1366, %s1353, 128, 128, 8
        $region72: #{tpu_custom_call.1} parent=55 // pred_fallthru
          _
      $region56: #{tpu_custom_call.1} parent=5 // pred_fallthru
        _
      %p1374 = scmp.le.s32.totalorder 2, %s22
      // Predicated region
      $region73: #{tpu_custom_call.1} parent=5 // pred_check
        %p1375 = pneg %p1374
      $region74: #{tpu_custom_call.1} parent=5 // pred_check_branch
        %1377 = sbr.rel (%p1375) target = $region76
      $region75: #{tpu_custom_call.1} parent=5 // pred_region
        %s1378 = ssub.s32 %s22, 2
        // Predicated region
        $region77: #{tpu_custom_call.1} parent=75 // pred_check
          %p1379 = pneg %p245
        $region78: #{tpu_custom_call.1} parent=75 // pred_check_branch
          %1381 = sbr.rel (%p1379) target = $region80
        $region79: #{tpu_custom_call.1} parent=75 // pred_region
          %s1382 = sand.u32 %s230, 1
          %s1383 = scalar_lea.sflag [#allocation4], %s1382
          %s1384 = sand.u32 %s230, 1
          %s1385 = smul.addr %s1384, 64
          %s1386 = scalar_lea.vmem [#allocation8], %s1385
          %1387 = dma.done %s1383, 1024
        $region80: #{tpu_custom_call.1} parent=75 // pred_fallthru
          _
      $region76: #{tpu_custom_call.1} parent=5 // pred_fallthru
        _
    $region6: #{tpu_custom_call.1} parent=1 // loop_footer
      %s26 = sadd.s32 1, %s22
    $region7: #{tpu_custom_call.1} parent=1 // loop_footer_branch
      %21 = sbr.rel target = $region3
    $region8: #{tpu_custom_call.1} parent=1 // loop_exit
      _
    %1388 = vsyncpa [#allocation3], 1
    %s1389 = scalar_lea.sflag [#allocation3], 1
    %1390 = vsyncpa %s1389, 1
    %1391 = vsyncpa [#allocation6], 1
    %1392 = vsyncpa [#allocation4], 1
    %s1393 = scalar_lea.sflag [#allocation4], 1
    %1394 = vsyncpa %s1393, 1

</llo_original>
